<compile_context>
chip_gen: v5e
topology: v5e:2x2
jax: 0.10.0
libtpu: 0.0.40
codegen_flags: <defaults>
</compile_context>

<pallas_src>
import numpy as np
import jax
import jax.numpy as jnp
from jax.experimental import pallas as pl
from jax.experimental.pallas import tpu as pltpu

LOG_100 = float(np.log(100.0))


def temperature_kernel(scale_ref, x_ref, o_ref):
    # scale_ref: SMEM (1,) f32 — precomputed exp(clamp(logit_scale, 0, log100))
    # x_ref / o_ref: VMEM (bm, bn) tiles
    s = scale_ref[0].astype(x_ref.dtype)      # native-dtype multiply (bf16 stays bf16)
    o_ref[...] = x_ref[...] * s


def _hw_budgets():
    """Generation-dependent (per_buffer_bytes, vmem_limit_bytes)."""
    vmem_cap = 64 * 1024 * 1024  # conservative default (v7x-class)
    try:
        info = pltpu.get_tpu_info()
        vmem_cap = int(getattr(info, "vmem_capacity_bytes", vmem_cap))
    except Exception:
        pass
    if vmem_cap > 64 * 1024 * 1024:          # v5e / v6e: 128 MiB physical VMEM
        return 16 * 1024 * 1024, 96 * 1024 * 1024
    else:                                    # v7x-class: 64 MiB physical VMEM
        return 8 * 1024 * 1024, 48 * 1024 * 1024


def _flatten_lane_dense(x):
    """Reshape (row-major, free for elementwise) into a lane-dense 2-D slab."""
    if x.ndim == 0:
        return x.reshape(1, 1)
    total = x.size
    last = x.shape[-1]
    if x.ndim >= 2 and last >= 128 and last % 128 == 0:
        return x.reshape(-1, last)            # already lane-dense
    if total > 0 and total % 128 == 0:
        # Narrow / misaligned last dim: repack the whole array into (rows, C)
        # with C a large multiple of 128 -> unmasked, full-lane stores.
        for cand in (2048, 1024, 512, 256, 128):
            if total % cand == 0:
                return x.reshape(-1, cand)
    if x.ndim == 1:
        return x.reshape(1, -1)
    return x.reshape(-1, last)                # fallback: masked stores (perf-only)


def _pick_tiles(M, N, dtype, per_buffer_bytes):
    """Pick (bm, bn): lane-dense, VMEM-budget-sized, >=2 grid blocks if possible."""
    itemsize = jnp.dtype(dtype).itemsize
    row_mult = {1: 32, 2: 16, 4: 8}.get(itemsize, 8)   # sublane packing multiple

    # Lane (last) dim: prefer a 128-multiple divisor of N (no masked tail col).
    if N % 128 == 0 and N > 2048:
        bn = 2048
        while bn >= 512 and N % bn != 0:
            bn -= 128
        if N % bn != 0:
            bn = 2048                                   # accept one masked tail block
    else:
        bn = N                                          # full-dim block is always legal

    rows_budget = max(1, per_buffer_bytes // max(1, bn * itemsize))
    if rows_budget >= M:
        bm = M
    else:
        bm = max(row_mult, (rows_budget // row_mult) * row_mult)

    # Guarantee >= 2 grid blocks (v7x: 2 TensorCores) when the array allows it.
    if pl.cdiv(M, bm) * pl.cdiv(N, bn) < 2:
        if M >= 2 * row_mult:
            half = pl.cdiv(M, 2)
            bm = max(row_mult, ((half + row_mult - 1) // row_mult) * row_mult)
        elif bn == N and N % 256 == 0:
            bn = N // 2
    return bm, bn


def temperature_forward(x, logit_scale, *, donate_x=False):
    """x: any-rank array; logit_scale: (1,) float32 parameter."""
    orig_shape = x.shape
    x2 = _flatten_lane_dense(x)
    M, N = x2.shape
    itemsize = jnp.dtype(x2.dtype).itemsize

    per_buffer_bytes, vmem_limit_bytes = _hw_budgets()
    bm, bn = _pick_tiles(M, N, x2.dtype, per_buffer_bytes)
    grid = (pl.cdiv(M, bm), pl.cdiv(N, bn))

    # Hoist the scalar math: one scalar XLA op, result lands in SMEM.
    scale = jnp.exp(jnp.clip(logit_scale.astype(jnp.float32), 0.0, LOG_100))

    out2 = pl.pallas_call(
        temperature_kernel,
        out_shape=jax.ShapeDtypeStruct((M, N), x2.dtype),
        grid=grid,
        in_specs=[
            pl.BlockSpec(memory_space=pltpu.MemorySpace.SMEM),   # scalar param
            pl.BlockSpec((bm, bn), lambda i, j: (i, j)),         # x tile
        ],
        out_specs=pl.BlockSpec((bm, bn), lambda i, j: (i, j)),
        compiler_params=pltpu.CompilerParams(
            dimension_semantics=("parallel", "parallel"),
            vmem_limit_bytes=vmem_limit_bytes,
        ),
        cost_estimate=pl.CostEstimate(
            flops=M * N, transcendentals=0, bytes_accessed=2 * M * N * itemsize),
        input_output_aliases=({1: 0} if donate_x else {}),
    )(scale, x2)
    return out2.reshape(orig_shape)


if __name__ == "__main__":
    # Deterministic parameter init (matches nn.Parameter(torch.tensor([log(1/0.07)])))
    initial_value = 0.07
    logit_scale = jnp.array([np.log(1.0 / initial_value)], dtype=jnp.float32)
    ref_scale = float(np.exp(np.clip(np.log(1.0 / initial_value), 0.0, LOG_100)))

    key = jax.random.PRNGKey(0)

    # Small (B, T, D) input with a narrow last dim (64 < 128) -> exercises the
    # lane-dense slab flattening path.
    x = jax.random.normal(key, (2, 8, 64), dtype=jnp.float32)
    out = jax.block_until_ready(temperature_forward(x, logit_scale))
    ref = x * ref_scale
    np.testing.assert_allclose(np.asarray(out), np.asarray(ref), rtol=1e-6, atol=1e-6)

    # 2-D, 128-aligned f32 path.
    x2d = jax.random.normal(jax.random.fold_in(key, 1), (16, 256), dtype=jnp.float32)
    out2d = jax.block_until_ready(temperature_forward(x2d, logit_scale))
    np.testing.assert_allclose(np.asarray(out2d), np.asarray(x2d 
                               * ref_scale), rtol=1e-6, atol=1e-6)

    # bf16 I/O path (halves HBM traffic); multiply happens natively in bf16.
    x_bf16 = x.astype(jnp.bfloat16)
    out_bf16 = jax.block_until_ready(temperature_forward(x_bf16, logit_scale))
    ref_bf16 = np.asarray(x_bf16, dtype=np.float32) * ref_scale
    np.testing.assert_allclose(np.asarray(out_bf16, dtype=np.float32),
                               ref_bf16, rtol=2e-2, atol=2e-2)

    print("KERNEL_OK")
</pallas_src>

<mosaic_0001>
module attributes {stable_mosaic.version = 11 : i64} {
  func.func @temperature_kernel(%arg0: i32, %arg1: i32, %arg2: memref<1xf32, #tpu.memory_space<smem>>, %arg3: memref<1x512xf32, #tpu.memory_space<vmem>>, %arg4: memref<1x512xf32, #tpu.memory_space<vmem>>) attributes {dimension_semantics = [#tpu.dimension_semantics<parallel>, #tpu.dimension_semantics<parallel>], iteration_bounds = array<i64: 1, 2>, scalar_prefetch = 0 : i64, scratch_operands = 0 : i64, tpu.core_type = #tpu.core_type<tc>, window_params = [{transform_indices = @transform_0, window_bounds = array<i64: 1>}, {transform_indices = @transform_1, window_bounds = array<i64: 1, 512>}, {transform_indices = @transform_2, window_bounds = array<i64: 1, 512>}]} {
    %c0 = arith.constant 0 : index
    %0 = memref.load %arg2[%c0] : memref<1xf32, #tpu.memory_space<smem>>
    %c0_0 = arith.constant 0 : index
    %c0_1 = arith.constant 0 : index
    %1 = vector.load %arg3[%c0_0, %c0_1] : memref<1x512xf32, #tpu.memory_space<vmem>>, vector<1x512xf32>
    %2 = vector.broadcast %0 : f32 to vector<1x512xf32>
    %3 = arith.mulf %1, %2 : vector<1x512xf32>
    %c0_2 = arith.constant 0 : index
    %c0_3 = arith.constant 0 : index
    %4 = vector.load %arg4[%c0_2, %c0_3] : memref<1x512xf32, #tpu.memory_space<vmem>>, vector<1x512xf32>
    tpu.vector_store %arg4[%c0_2, %c0_3], %3 {strides = array<i32>} : memref<1x512xf32, #tpu.memory_space<vmem>>, vector<1x512xf32>,
    return
  }
  func.func @transform_0(%arg0: i32, %arg1: i32) -> i32 {
    %c0_i32 = arith.constant 0 : i32
    %c0_i32_0 = arith.constant 0 : i32
    return %c0_i32 : i32
  }
  func.func @transform_1(%arg0: i32, %arg1: i32) -> (i32, i32) {
    %c0_i32 = arith.constant 0 : i32
    return %arg0, %arg1 : i32, i32
  }
  func.func @transform_2(%arg0: i32, %arg1: i32) -> (i32, i32) {
    %c0_i32 = arith.constant 0 : i32
    return %arg0, %arg1 : i32, i32
  }
}

</mosaic_0001>

<llo_original>
// kernel: tpu_custom_call.1
$region0: #{tpu_custom_call.1}
  #allocation0 [shape = 'u32[]', space=smem, size = 0x4, offset = 0x4, fixed_abs, tag = 'smem constant byte address 0x4 - core index']
  #allocation1 [shape = 'u32[72,128]{1,0:T(1,128)}', space=vmem, size = 0x9000, scoped, tag = 'internal scratch']
  #allocation2 [shape = 'f32[1]{0:T(128)S(6)}', space=smem, size = 0x200, scoped, tag = 'scoped memory for tpu_custom_call.1']
  %s0 = inlined_call_operand.<no memory space> [shape: f32[1], index: 0, kind: input, shape index: {}]
  %s1 = inlined_call_operand.hbm [shape: f32[1,1024], index: 1, kind: input, shape index: {}]
  %s2 = inlined_call_operand.hbm [shape: f32[1,1024], index: 2, kind: output, shape index: {}]
  %s3 = sld [smem:[#allocation0]]
  $region45: #{tpu_custom_call.1} parent=0
    _
  %s5 = ssub.s32 1, %s3
  %s6 = scalar_select 0, %s5, %s3
  %7 = sst [smem:[#allocation2]] %s0
  $region1: #{tpu_custom_call.1} parent=0
    #allocation3 [shape = 'u8[4096]{0}', space=vmem, size = 0x1000, scoped, tag = 'input window, operand 1']
    #allocation4 [shape = 's32[2]{0}', space=sflag, size = 0x8, scoped, tag = 'scoped memory for tpu_custom_call.1']
    #allocation5 [shape = 's32[2]{0}', space=sflag, size = 0x8, scoped, tag = 'scoped memory for tpu_custom_call.1']
    #allocation6 [shape = 'u8[4096]{0}', space=vmem, size = 0x1000, scoped, tag = 'output window, operand 0']
    %8 = vsyncpa [#allocation4], 0
    %s9 = scalar_lea.sflag [#allocation4], 1
    %10 = vsyncpa %s9, 0
    %11 = vsyncpa [#allocation5], 0
    %s12 = scalar_lea.sflag [#allocation5], 1
    %13 = vsyncpa %s12, 0
    loop: start=0, step=1, limit=4
    $region2: #{tpu_custom_call.1} parent=1 // loop_pre_header
      _
    $region3: #{tpu_custom_call.1} parent=1 // loop_header
      %s15 = sphi 0, %s19
      %p16 = scmp.ge.s32.totalorder %s15, 4
      %s22 = sphi 0, %s34
      %s23 = sphi 0, %s30
      %s24 = sphi 0, %s22
      %s25 = sphi 0, %s23
      %s26 = sphi 0, %s24
      %s27 = sphi 0, %s25
      %s35 = sphi 0, %s35
      %s37 = sphi 0, %s35
      %s38 = sphi 0, %s37
      %s52 = sphi 0, %s38
      %s60 = sphi 0, %s62
      %s63 = sphi 0, %s60
      %s64 = sphi 0, %s63
      %s80 = sphi 0, %s64
      %s88 = sphi 0, %s90
      %s91 = sphi 0, %s88
      %s92 = sphi 0, %s91
      %s108 = sphi 0, %s92
    $region4: #{tpu_custom_call.1} parent=1 // loop_header_branch
      %18 = sbr.rel (%p16) target = $region8
    $region5: #{tpu_custom_call.1} parent=1 // loop_body
      %s20 = ssub.s32 %s15, 1
      %s21 = ssub.s32 %s15, 2
      %s28 = sadd.s32 1, %s23
      %p29 = scmp.ge.s32.totalorder %s28, 2
      %s30 = scalar_select %p29, 0, %s28
      %s31 = sadd.s32 1, %s22
      %s32 = scalar_select %p29, %s31, %s22
      %p33 = scmp.ge.s32.totalorder %s32, 1
      %s34 = scalar_select %p33, 0, %s32
      %s36 = sadd.s32 %s35, 1
      %p39 = scmp.eq.s32.totalorder %s15, 1
      %p40 = scmp.ne.s32.totalorder %s35, %s37
      %p41 = scmp.eq.s32.totalorder %s15, 0
      %p42 = por %p40, %p41
      %p43 = scmp.ne.s32.totalorder %s35, %s37
      %p44 = scmp.eq.s32.totalorder %s20, 1
      %p45 = por %p43, %p44
      %p46 = scmp.ne.s32.totalorder %s37, %s38
      %p47 = scmp.eq.s32.totalorder %s20, 0
      %p48 = por %p46, %p47
      %p49 = scmp.ne.s32.totalorder %s37, %s38
      %p50 = scmp.eq.s32.totalorder %s21, 1
      %p51 = por %p49, %p50
      %p53 = scmp.ne.s32.totalorder %s38, %s52
      %p54 = scmp.eq.s32.totalorder %s21, 0
      %p55 = por %p53, %p54
      %s56 = ssub.s32 %s22, %s34
      %s57 = ssub.s32 %s23, %s30
      %s58 = sor.u32 %s56, %s57
      %p59 = scmp.eq.s32.totalorder %s58, 0
      %s61 = sadd.s32 %s60, 1
      %s62 = scalar_select %p59, %s60, %s61
      %p65 = pneg %p59
      %p66 = scmp.eq.s32.totalorder %s15, 1
      %p67 = por %p65, %p66
      %p68 = scmp.ne.s32.totalorder %s60, %s63
      %p69 = scmp.eq.s32.totalorder %s15, 0
      %p70 = por %p68, %p69
      %p71 = scmp.ne.s32.totalorder %s60, %s63
      %p72 = scmp.eq.s32.totalorder %s20, 1
      %p73 = por %p71, %p72
      %p74 = scmp.ne.s32.totalorder %s63, %s64
      %p75 = scmp.eq.s32.totalorder %s20, 0
      %p76 = por %p74, %p75
      %p77 = scmp.ne.s32.totalorder %s63, %s64
      %p78 = scmp.eq.s32.totalorder %s21, 1
      %p79 = por %p77, %p78
      %p81 = scmp.ne.s32.totalorder %s64, %s80
      %p82 = scmp.eq.s32.totalorder %s21, 0
      %p83 = por %p81, %p82
      %s84 = ssub.s32 %s22, %s34
      %s85 = ssub.s32 %s23, %s30
      %s86 = sor.u32 %s84, %s85
      %p87 = scmp.eq.s32.totalorder %s86, 0
      %s89 = sadd.s32 %s88, 1
      %s90 = scalar_select %p87, %s88, %s89
      %p93 = pneg %p87
      %p94 = scmp.eq.s32.totalorder %s15, 1
      %p95 = por %p93, %p94
      %p96 = scmp.ne.s32.totalorder %s88, %s91
      %p97 = scmp.eq.s32.totalorder %s15, 0
      %p98 = por %p96, %p97
      %p99 = scmp.ne.s32.totalorder %s88, %s91
      %p100 = scmp.eq.s32.totalorder %s20, 1
      %p101 = por %p99, %p100
      %p102 = scmp.ne.s32.totalorder %s91, %s92
      %p103 = scmp.eq.s32.totalorder %s20, 0
      %p104 = por %p102, %p103
      %p105 = scmp.ne.s32.totalorder %s91, %s92
      %p106 = scmp.eq.s32.totalorder %s21, 1
      %p107 = por %p105, %p106
      %p109 = scmp.ne.s32.totalorder %s92, %s108
      %p110 = scmp.eq.s32.totalorder %s21, 0
      %p111 = por %p109, %p110
      %p112 = scmp.le.s32.totalorder 1, %s15
      %p113 = scmp.lt.s32.totalorder %s15, 3
      %p114 = pnand %p112, %p113
      %p115 = pneg %p114
      // Predicated region
      $region9: #{tpu_custom_call.1} parent=5 // pred_check
        _
      $region10: #{tpu_custom_call.1} parent=5 // pred_check_branch
        %117 = sbr.rel (%p114) target = $region12
      $region11: #{tpu_custom_call.1} parent=5 // pred_region
        %s118 = ssub.s32 %s15, 1
        // Predicated region
        $region13: #{tpu_custom_call.1} parent=11 // pred_check
          %p119 = pneg %p48
        $region14: #{tpu_custom_call.1} parent=11 // pred_check_branch
          %121 = sbr.rel (%p119) target = $region16
        $region15: #{tpu_custom_call.1} parent=11 // pred_region
          _
        $region16: #{tpu_custom_call.1} parent=11 // pred_fallthru
          _
      $region12: #{tpu_custom_call.1} parent=5 // pred_fallthru
        _
      %p122 = scmp.lt.s32.totalorder %s15, 2
      // Predicated region
      $region17: #{tpu_custom_call.1} parent=5 // pred_check
        %p123 = pneg %p122
      $region18: #{tpu_custom_call.1} parent=5 // pred_check_branch
        %125 = sbr.rel (%p123) target = $region20
      $region19: #{tpu_custom_call.1} parent=5 // pred_region
        // Predicated region
        $region21: #{tpu_custom_call.1} parent=19 // pred_check
          %p126 = pneg %p70
        $region22: #{tpu_custom_call.1} parent=19 // pred_check_branch
          %128 = sbr.rel (%p126) target = $region24
        $region23: #{tpu_custom_call.1} parent=19 // pred_region
          %s129 = sand.u32 %s60, 1
          %s130 = scalar_lea.sflag [#allocation4], %s129
          %s131 = sand.u32 %s60, 1
          %s132 = smul.addr %s131, 4
          %s133 = scalar_lea.vmem [#allocation3], %s132
          %s134 = smul.u32 4, %s23
          %136 = vsyncadd %s130, 0
          %s137 = smul.addr %s22, 8
          %s138 = sadd.s32 %s134, %s137
          %s139 = scalar_lea.hbm %s1, %s138
          %s141 = sshll.u32 %s139, 4
          %s142 = int_to_ptr.hbm [resolvable:$true] %s141
          %s143 = sshll.u32 %s133, 4
          %s144 = int_to_ptr.vmem [resolvable:$true] %s143
          %146 = dma.hbm_to_vmem [thread:$0]  %s142, 64, %s144, %s130
        $region24: #{tpu_custom_call.1} parent=19 // pred_fallthru
          _
      $region20: #{tpu_custom_call.1} parent=5 // pred_fallthru
        _
      %p147 = scmp.le.s32.totalorder 1, %s15
      %p148 = scmp.lt.s32.totalorder %s15, 3
      %p149 = pnand %p147, %p148
      %p150 = pneg %p149
      // Predicated region
      $region25: #{tpu_custom_call.1} parent=5 // pred_check
        _
      $region26: #{tpu_custom_call.1} parent=5 // pred_check_branch
        %152 = sbr.rel (%p149) target = $region28
      $region27: #{tpu_custom_call.1} parent=5 // pred_region
        %s153 = ssub.s32 %s15, 1
        %s154 = sand.u32 %s63, 1
        %s155 = scalar_lea.sflag [#allocation4], %s154
        %s156 = sand.u32 %s63, 1
        %s157 = smul.addr %s156, 4
        %s158 = scalar_lea.vmem [#allocation3], %s157
        // Predicated region
        $region29: #{tpu_custom_call.1} parent=27 // pred_check
          %p159 = pneg %p76
        $region30: #{tpu_custom_call.1} parent=27 // pred_check_branch
          %161 = sbr.rel (%p159) target = $region32
        $region31: #{tpu_custom_call.1} parent=27 // pred_region
          %163 = dma.done %s155, 64
        $region32: #{tpu_custom_call.1} parent=27 // pred_fallthru
          _
        %p164 = pneg %p48
        %p165 = pneg %p45
        %s166 = sand.u32 %s63, 1
        %s167 = scalar_lea.sflag [#allocation4], %s166
        %s168 = sand.u32 %s63, 1
        %s169 = smul.addr %s168, 4
        %s170 = scalar_lea.vmem [#allocation3], %s169
        %p171 = pneg %p76
        %p172 = pneg %p73
        %p173 = pneg %p104
        %p174 = pneg %p101
        %s175 = sand.u32 %s91, 1
        %s176 = scalar_lea.sflag [#allocation5], %s175
        %s177 = sand.u32 %s91, 1
        %s178 = smul.addr %s177, 4
        %s179 = scalar_lea.vmem [#allocation6], %s178
        %s180 = smul.u32 4, %s25
        %s181 = smul.u32 4, %s25
        %s182 = sld [smem:[#allocation2]]
        %v183 = vld [vmem:[%s158] sm:$0xf]
        %v184 = vstv %s182
        %v185 = vmul.f32 %v183, %v184
        %v186 = vlaneseq
        %vm187 = vcmp.ge.s32.totalorder %v186, 0
        %vm188 = vcmp.lt.s32.totalorder %v186, 512
        %vm189 = vmand %vm187, %vm188
        %190 = vst.msk [vmem:[%s179] sm:$0xf] %vm189, %v185
        %s191 = sand.u32 %s91, 1
        %s192 = scalar_lea.sflag [#allocation5], %s191
        %s193 = sand.u32 %s91, 1
        %s194 = smul.addr %s193, 4
        %s195 = scalar_lea.vmem [#allocation6], %s194
        // Predicated region
        $region33: #{tpu_custom_call.1} parent=27 // pred_check
          %p196 = pneg %p101
        $region34: #{tpu_custom_call.1} parent=27 // pred_check_branch
          %198 = sbr.rel (%p196) target = $region36
        $region35: #{tpu_custom_call.1} parent=27 // pred_region
          %s199 = smul.u32 4, %s25
          %201 = vsyncadd %s192, 0
          %s202 = smul.addr %s24, 8
          %s203 = sadd.s32 %s199, %s202
          %s204 = scalar_lea.hbm %s2, %s203
          %s206 = sshll.u32 %s195, 4
          %s207 = int_to_ptr.vmem [resolvable:$true] %s206
          %s208 = sshll.u32 %s204, 4
          %s209 = int_to_ptr.hbm [resolvable:$true] %s208
          %211 = dma.vmem_to_hbm [thread:$0]  %s207, 64, %s209, %s192
        $region36: #{tpu_custom_call.1} parent=27 // pred_fallthru
          _
      $region28: #{tpu_custom_call.1} parent=5 // pred_fallthru
        _
      %p212 = scmp.le.s32.totalorder 2, %s15
      // Predicated region
      $region37: #{tpu_custom_call.1} parent=5 // pred_check
        %p213 = pneg %p212
      $region38: #{tpu_custom_call.1} parent=5 // pred_check_branch
        %215 = sbr.rel (%p213) target = $region40
      $region39: #{tpu_custom_call.1} parent=5 // pred_region
        %s216 = ssub.s32 %s15, 2
        // Predicated region
        $region41: #{tpu_custom_call.1} parent=39 // pred_check
          %p217 = pneg %p107
        $region42: #{tpu_custom_call.1} parent=39 // pred_check_branch
          %219 = sbr.rel (%p217) target = $region44
        $region43: #{tpu_custom_call.1} parent=39 // pred_region
          %s220 = sand.u32 %s92, 1
          %s221 = scalar_lea.sflag [#allocation5], %s220
          %s222 = sand.u32 %s92, 1
          %s223 = smul.addr %s222, 4
          %s224 = scalar_lea.vmem [#allocation6], %s223
          %226 = dma.done %s221, 64
        $region44: #{tpu_custom_call.1} parent=39 // pred_fallthru
          _
      $region40: #{tpu_custom_call.1} parent=5 // pred_fallthru
        _
    $region6: #{tpu_custom_call.1} parent=1 // loop_footer
      %s19 = sadd.s32 1, %s15
    $region7: #{tpu_custom_call.1} parent=1 // loop_footer_branch
      %14 = sbr.rel target = $region3
    $region8: #{tpu_custom_call.1} parent=1 // loop_exit
      _
    %227 = vsyncpa [#allocation4], 1
    %s228 = scalar_lea.sflag [#allocation4], 1
    %229 = vsyncpa %s228, 1
    %230 = vsyncpa [#allocation5], 1
    %s231 = scalar_lea.sflag [#allocation5], 1
    %232 = vsyncpa %s231, 1

</llo_original>
